<compile_context>
chip_gen: v7x
topology: tpu7x:2x2x1
jax: 0.10.0
libtpu: 0.0.40
codegen_flags: <defaults>
</compile_context>

<pallas_src>
import functools
import math

import jax
import jax.numpy as jnp
from jax import lax
from jax.experimental import pallas as pl
from jax.experimental.pallas import tpu as pltpu

# Explicit scoped-VMEM budget: < 64 MiB so the same configuration also fits v7x's physical VMEM.
# TODO(synk): at production d_model/d_ffn derive this from weights(x1) + value(x2) + tiles.
_VMEM_LIMIT_BYTES = 48 * 1024 * 1024


# --------------------------------------------------------------------------------------
# Kernel 1: per-batch value projection + padding mask (grid over B, NOT over B*Q).
# Output is bf16 to halve the value tensor's HBM round trip.
# --------------------------------------------------------------------------------------
def _value_proj_kernel(x_ref, pad_ref, w_ref, b_ref, o_ref):
    x = x_ref[0].astype(jnp.bfloat16)                 # (S, D)
    keep = 1.0 - pad_ref[0]                           # (S, 1) f32
    y = jnp.dot(x, w_ref[...], preferred_element_type=jnp.float32) + b_ref[...]
    o_ref[0] = (y * keep).astype(o_ref.dtype)


def value_projection(input_flatten, padding_mask, w, b):
    B, S, D = input_flatten.shape
    pad = padding_mask.astype(jnp.float32).reshape(B, S, 1)
    # TODO(synk): at production S (thousands) add a second grid axis tiling S (TS ~ 512 on
    # v5e/v6e, 256-512 on v7x); the toy S fits a single VMEM block.
    return pl.pallas_call(
        _value_proj_kernel,
        out_shape=jax.ShapeDtypeStruct((B, S, D), jnp.bfloat16),
        grid=(B,),
        in_specs=[
            pl.BlockSpec((1, S, D), lambda b_: (b_, 0, 0)),
            pl.BlockSpec((1, S, 1), lambda b_: (b_, 0, 0)),
            pl.BlockSpec((D, D), lambda b_: (0, 0)),
            pl.BlockSpec((1, D), lambda b_: (0, 0)),
        ],
        out_specs=pl.BlockSpec((1, S, D), lambda b_: (b_, 0, 0)),
        compiler_params=pltpu.CompilerParams(
            dimension_semantics=("parallel",), vmem_limit_bytes=_VMEM_LIMIT_BYTES),
    )(input_flatten, pad, w.astype(jnp.bfloat16), b.reshape(1, D))


# --------------------------------------------------------------------------------------
# In-kernel LayerNorm helper (PyTorch semantics: biased variance, eps=1e-5), f32 math.
# --------------------------------------------------------------------------------------
def _layernorm(x, g, b, eps):
    mean = jnp.mean(x, axis=-1, keepdims=True)
    xc = x - mean
    var = jnp.mean(xc * xc, axis=-1, keepdims=True)
    return xc * lax.rsqrt(var + eps) * g + b


# --------------------------------------------------------------------------------------
# Kernel 2: whole TransformerDSACapLayer for TQ event queries per step, grid=(B, Q//TQ).
# --------------------------------------------------------------------------------------
def _fused_layer_kernel(h_ref, mask_ref, q_ref, ref_ref, v_ref,
                        wqkv_ref, bqkv_ref, n1g_ref, n1b_ref,
                        pwh_ref, pwq_ref, pb_ref,
                        oaw_ref, oab_ref, outw_ref, outb_ref,
                        n2g_ref, n2b_ref,
                        f1w_ref, f1b_ref, f2w_ref, f2b_ref,
                        n3g_ref, n3b_ref,
                        o_ref, sa_ref, w_ref,
                        *, tq, cap_len, d_model, n_heads, n_levels, n_points,
                        temporal_shapes, level_starts, eps):
    TQ, L, D = tq, cap_len, d_model
    M = TQ * L
    Dh = D // n_heads
    LP = n_levels * n_points
    HLP = n_heads * LP
    bf16 = jnp.bfloat16

    h0 = h_ref[0].reshape(M, D)                       # (M, D) f32 activations
    mask = mask_ref[...]                              # (L, L) shared additive mask (0 / -1e4)

    # ---- BertSelfAttention (no output dense): fused QKV projection, batched over TQ ----
    qkv = jnp.dot(h0.astype(bf16), wqkv_ref[...],
                  preferred_element_type=jnp.float32) + bqkv_ref[...]
    scale = 1.0 / math.sqrt(Dh)
    for hd in range(n_heads):                         # static unroll, per-head -> scratch slab
        qh = qkv[:, hd * Dh:(hd + 1) * Dh].reshape(TQ, L, Dh).astype(bf16)
        kh = qkv[:, D + hd * Dh:D + (hd + 1) * Dh].reshape(TQ, L, Dh).astype(bf16)
        vh = qkv[:, 2 * D + hd * Dh:2 * D + (hd + 1) * Dh].reshape(TQ, L, Dh).astype(bf16)
        s = jnp.einsum('bqd,bkd->bqk', qh, kh,
                       preferred_element_type=jnp.float32) * scale + mask[None]
        s = s - jnp.max(s, axis=-1, keepdims=True)
        p = jnp.exp(s)
        p = p * pl.reciprocal(jnp.sum(p, axis=-1, keepdims=True), approx=True)
        ctx = jnp.einsum('bqk,bkd->bqd', p.astype(bf16), vh,
                         preferred_element_type=jnp.float32)
        sa_ref[:, hd * Dh:(hd + 1) * Dh] = ctx.reshape(M, Dh)   # static-slice store, no concat
    h1 = _layernorm(h0 + sa_ref[...], n1g_ref[...], n1b_ref[...], eps)

    # ---- dim_project: cat([h1, q_rep]) @ W  ==  h1 @ W[:D] + broadcast(q @ W[D:]) ----
    q_proj = jnp.dot(q_ref[0].astype(bf16), pwq_ref[...],
                     preferred_element_type=jnp.float32)         # (TQ, D): no L-fold replication
    h2 = (jnp.dot(h1.astype(bf16), pwh_ref[...], preferred_element_type=jnp.float32)
          + jnp.broadcast_to(q_proj[:, None, :], (TQ, L, D)).reshape(M, D)
          + pb_ref[...])

    # ---- MSDeformAttn: fused sampling-offset + attention-weight projection ----
    oa = jnp.dot(h2.astype(bf16), oaw_ref[...],
                 preferred_element_type=jnp.float32) + oab_ref[...]
    off_all = oa[:, :HLP]                             # (M, H*Lv*P)
    logit_all = oa[:, HLP:]                           # (M, H*Lv*P)
    refs = jnp.broadcast_to(ref_ref[0][:, None, :], (TQ, L, n_levels)).reshape(M, n_levels)
    v = v_ref[0]                                      # (S, D) bf16, padding mask pre-applied
    out_w = outw_ref[...]                             # (D, D) bf16

    # Per-level iota grids hoisted out of the head loop (JAX does not CSE broadcast_in_dim).
    grids = [lax.broadcasted_iota(jnp.float32, (1, 1, int(temporal_shapes[l])), 2)
             for l in range(n_levels)]

    cross = jnp.zeros((M, D), jnp.float32)
    for hd in range(n_heads):                         # static unroll
        off_h = off_all[:, hd * LP:(hd + 1) * LP]
        logit_h = logit_all[:, hd * LP:(hd + 1) * LP]
        logit_h = logit_h - jnp.max(logit_h, axis=-1, keepdims=True)
        pw = jnp.exp(logit_h)
        attn_h = pw * pl.reciprocal(jnp.sum(pw, axis=-1, keepdims=True), approx=True)
        for lvl in range(n_levels):                   # static unroll; write into the (M, S) slab
            T = int(temporal_shapes[lvl])
            start = level_starts[lvl]
            off_lp = off_h[:, lvl * n_points:(lvl + 1) * n_points]   # (M, P)
            a_lp = attn_h[:, lvl * n_points:(lvl + 1) * n_points]    # (M, P)
            # grid_sample pixel coord, align_corners=False: (ref + off/T)*T - 0.5
            pos = refs[:, lvl:lvl + 1] * float(T) + off_lp - 0.5     # (M, P)
            tri = jnp.maximum(1.0 - jnp.abs(pos[:, :, None] - grids[lvl]), 0.0)
            w_ref[:, start:start + T] = jnp.sum(a_lp[:, :, None] * tri, axis=1)
        s_h = jnp.dot(w_ref[...].astype(bf16), v[:, hd * Dh:(hd + 1) * Dh],
                      preferred_element_type=jnp.float32)            # (M, S) @ (S, Dh)
        # fold the MSDeformAttn output projection per head -> no head concatenation
        cross = cross + jnp.dot(s_h.astype(bf16), out_w[hd * Dh:(hd + 1) * Dh, :],
                                preferred_element_type=jnp.float32)
    cross = cross + outb_ref[...]
    h3 = _layernorm(h2 + cross, n2g_ref[...], n2b_ref[...], eps)

    # ---- FFN (relu) + residual + norm3 ----
    f1 = jnp.maximum(
        jnp.dot(h3.astype(bf16), f1w_ref[...], preferred_element_type=jnp.float32)
        + f1b_ref[...], 0.0)
    f2 = jnp.dot(f1.astype(bf16), f2w_ref[...], preferred_element_type=jnp.float32) + f2b_ref[...]
    out = _layernorm(h3 + f2, n3g_ref[...], n3b_ref[...], eps)
    o_ref[0] = out.reshape(TQ, L * D).astype(o_ref.dtype)            # lane-dense (>=128) store


# --------------------------------------------------------------------------------------
# Parameter init (deterministic, synthetic).  Weights stored as (in, out), f32 master copy.
# --------------------------------------------------------------------------------------
def init_params(key, d_model, d_ffn, n_heads, n_levels, n_points):
    keys = jax.random.split(key, 16)
    w = lambda k, s: 0.02 * jax.random.normal(k, s, dtype=jnp.float32)
    hlp = n_heads * n_levels * n_points
    p = {}
    p["sa_wq"], p["sa_wk"], p["sa_wv"] = (w(keys[0], (d_model, d_model)),
                                          w(keys[1], (d_model, d_model)),
                                          w(keys[2], (d_model, d_model)))
    p["sa_bq"] = p["sa_bk"] = p["sa_bv"] = jnp.zeros((d_model,), jnp.float32)
    p["norm1_g"] = jnp.ones((d_model,), jnp.float32); p["norm1_b"] = jnp.zeros((d_model,), jnp.float32)
    p["proj_w"] = w(keys[3], (2 * d_model, d_model)); p["proj_b"] = jnp.zeros((d_model,), jnp.float32)
    p["off_w"] = w(keys[4], (d_model, hlp)); p["off_b"] = w(keys[5], (hlp,))
    p["aw_w"] = w(keys[6], (d_model, hlp)); p["aw_b"] = jnp.zeros((hlp,), jnp.float32)
    p["val_w"] = w(keys[7], (d_model, d_model)); p["val_b"] = jnp.zeros((d_model,), jnp.float32)
    p["out_w"] = w(keys[8], (d_model, d_model)); p["out_b"] = jnp.zeros((d_model,), jnp.float32)
    p["norm2_g"] = jnp.ones((d_model,), jnp.float32); p["norm2_b"] = jnp.zeros((d_model,), jnp.float32)
    p["ffn1_w"] = w(keys[9], (d_model, d_ffn)); p["ffn1_b"] = jnp.zeros((d_ffn,), jnp.float32)
    p["ffn2_w"] = w(keys[10], (d_ffn, d_model)); p["ffn2_b"] = jnp.zeros((d_model,), jnp.float32)
    p["norm3_g"] = jnp.ones((d_model,), jnp.float32); p["norm3_b"] = jnp.zeros((d_model,), jnp.float32)
    return p


# --------------------------------------------------------------------------------------
# Full forward pass (2 pallas_calls; host side does only one-time weight fusion / casts).
# --------------------------------------------------------------------------------------
def transformer_dsa_cap_layer(params, hidden_states, query, reference_points,
                              input_flatten, input_spatial_shapes,
                              input_level_start_index, input_padding_mask,
                              attention_mask, *, n_heads, n_levels, n_points,
                              queries_per_step=None):
    # All dropouts (dropout1..4 + attention dropout) are identity (eval mode).
    N, L, D = hidden_states.shape
    B, Q, _ = query.shape
    S = input_flatten.shape[1]
    F_ = params["ffn1_w"].shape[1]
    HLP = n_heads * n_levels * n_points
    Lv = n_levels
    assert N == B * Q
    assert reference_points.shape[-1] == 1            # temporal (points_dim == 1) path
    temporal_shapes = tuple(int(t) for t in input_spatial_shapes)
    assert sum(temporal_shapes) == S
    level_starts, acc = [], 0
    for t in temporal_shapes:
        level_starts.append(acc)
        acc += t
    level_starts = tuple(level_starts)
    # TODO(synk): input_level_start_index is implied by the static temporal shapes.
    del input_level_start_index

    # Shared additive (causal) mask: ship a single (L, L) block with a constant index_map
    # instead of the module's replicated (N, 1, L, L) extended mask.
    if attention_mask.ndim == 4:
        # TODO(synk): assumes the extended mask is identical across samples (causal decode
        # mask); genuinely per-sample masks would need a (b, qb)-indexed BlockSpec instead.
        attention_mask = attention_mask[0, 0]
    mask2d = attention_mask.astype(jnp.float32)

    # TQ queries per grid step => M = TQ*L matmul rows.  Target TQ*L >= 256 on v6e/v7x
    # (>= 128 on v5e) once Q is large; toy shapes cap at TQ = Q.
    TQ = Q if queries_per_step is None else queries_per_step
    assert Q % TQ == 0 and (TQ == Q or TQ % 8 == 0)

    # ---- (1) value projection once per batch (de-replicated, bf16, padding mask applied) ----
    value = value_projection(input_flatten, input_padding_mask,
                             params["val_w"], params["val_b"])          # (B, S, D) bf16
    # TODO(synk): could be folded into the fused kernel via a persistent VMEM scratch
    # recomputed when the batch index changes; kept as a separate bf16-output kernel here.

    # ---- one-time weight fusion / bf16 MXU-operand casts (trace-time, outside kernels) ----
    bf16 = jnp.bfloat16
    wqkv = jnp.concatenate([params["sa_wq"], params["sa_wk"], params["sa_wv"]], axis=1).astype(bf16)
    bqkv = jnp.concatenate([params["sa_bq"], params["sa_bk"], params["sa_bv"]]).reshape(1, 3 * D)
    pwh = params["proj_w"][:D].astype(bf16)
    pwq = params["proj_w"][D:].astype(bf16)
    oaw = jnp.concatenate([params["off_w"], params["aw_w"]], axis=1).astype(bf16)   # (D, 2*HLP)
    oab = jnp.concatenate([params["off_b"], params["aw_b"]]).reshape(1, 2 * HLP)
    outw = params["out_w"].astype(bf16)
    f1w = params["ffn1_w"].astype(bf16)
    f2w = params["ffn2_w"].astype(bf16)
    row = lambda x: x.reshape(1, -1)

    # Lane-dense activation layout: (B, Q, L*D) keeps the stored last dim >= 128 lanes even
    # when d_model < 128 (toy D=32); the wrapper reshapes back afterwards.
    hidden_r = hidden_states.reshape(B, Q, L * D)
    query_r = query                                                     # (B, Q, D)
    ref_r = reference_points.reshape(B, Q, Lv)                          # points_dim == 1 path

    kernel = functools.partial(
        _fused_layer_kernel, tq=TQ, cap_len=L, d_model=D, n_heads=n_heads,
        n_levels=n_levels, n_points=n_points, temporal_shapes=temporal_shapes,
        level_starts=level_starts, eps=1e-5)

    def run(weight_pipeline_mode):
        if weight_pipeline_mode is None:
            wspec = lambda shape: pl.BlockSpec(shape, lambda b, qb: (0, 0))
        else:
            wspec = lambda shape: pl.BlockSpec(shape, lambda b, qb: (0, 0),
                                               pipeline_mode=weight_pipeline_mode)
        return pl.pallas_call(
            kernel,
            out_shape=jax.ShapeDtypeStruct((B, Q, L * D), hidden_states.dtype),
            grid=(B, Q // TQ),
            in_specs=[
                pl.BlockSpec((1, TQ, L * D), lambda b, qb: (b, qb, 0)),  # hidden (lane-dense)
                wspec((L, L)),                                           # shared causal mask
                pl.BlockSpec((1, TQ, D), lambda b, qb: (b, qb, 0)),      # event queries
                pl.BlockSpec((1, TQ, Lv), lambda b, qb: (b, qb, 0)),     # reference points
                pl.BlockSpec((1, S, D), lambda b, qb: (b, 0, 0)),        # value: per batch only
                wspec((D, 3 * D)), wspec((1, 3 * D)),                    # fused QKV
                wspec((1, D)), wspec((1, D)),                            # norm1
                wspec((D, D)), wspec((D, D)), wspec((1, D)),             # dim_project split
                wspec((D, 2 * HLP)), wspec((1, 2 * HLP)),                # offsets + attn weights
                wspec((D, D)), wspec((1, D)),                            # msda output proj
                wspec((1, D)), wspec((1, D)),                            # norm2
                wspec((D, F_)), wspec((1, F_)),                          # ffn1
                wspec((F_, D)), wspec((1, D)),                           # ffn2
                wspec((1, D)), wspec((1, D)),                            # norm3
            ],
            out_specs=pl.BlockSpec((1, TQ, L * D), lambda b, qb: (b, qb, 0)),
            scratch_shapes=[
                pltpu.VMEM((TQ * L, D), jnp.float32),   # self-attn head slab (no lane concat)
                pltpu.VMEM((TQ * L, S), jnp.float32),   # deformable sampling-weight slab
            ],
            compiler_params=pltpu.CompilerParams(
                dimension_semantics=("parallel", "parallel"),
                vmem_limit_bytes=_VMEM_LIMIT_BYTES),
        )(hidden_r, mask2d, query_r, ref_r, value,
          wqkv, bqkv, row(params["norm1_g"]), row(params["norm1_b"]),
          pwh, pwq, row(params["proj_b"]),
          oaw, oab, outw, row(params["out_b"]),
          row(params["norm2_g"]), row(params["norm2_b"]),
          f1w, row(params["ffn1_b"]), f2w, row(params["ffn2_b"]),
          row(params["norm3_g"]), row(params["norm3_b"]))

    try:
        # Single-buffer the constant weight blocks (halves their resident VMEM; key on v7x).
        out = run(pl.Buffered(1))
    except Exception:
        # TODO(synk): pl.Buffered(1) unsupported on this JAX build; default double buffering.
        out = run(None)

    return out.reshape(N, L, D)


if __name__ == "__main__":
    key = jax.random.PRNGKey(0)
    d_model, d_ffn = 32, 64
    n_heads, n_levels, n_points = 4, 2, 2
    B, Q, L = 2, 3, 8                       # batch, event queries, max caption length
    temporal_shapes = (8, 4)                # per-level temporal sizes (static)
    S = sum(temporal_shapes)
    N = B * Q

    kp, k0, k1, k2, k3, k4 = jax.random.split(key, 6)
    params = init_params(kp, d_model, d_ffn, n_heads, n_levels, n_points)

    hidden_states = jax.random.normal(k0, (N, L, d_model), jnp.float32)
    query = jax.random.normal(k1, (B, Q, d_model), jnp.float32)
    reference_points = jax.random.uniform(k2, (B, Q, n_levels, 1), jnp.float32)
    input_flatten = jax.random.normal(k3, (B, S, d_model), jnp.float32)
    input_spatial_shapes = temporal_shapes
    input_level_start_index = jnp.array([0, temporal_shapes[0]], jnp.int32)
    input_padding_mask = (jax.random.uniform(k4, (B, S)) < 0.1)
    # Shared Bert-style additive causal mask (0 keep / -1e4 masked), one (L, L) block.
    causal = jnp.tril(jnp.ones((L, L), jnp.float32))
    attention_mask = (1.0 - causal) * -10000.0

    out = transformer_dsa_cap_layer(params, hidden_states, query, reference_points,
                                    input_flatten, input_spatial_shapes,
                                    input_level_start_index, input_padding_mask,
                                    attention_mask,
                                    n_heads=n_heads, n_levels=n_levels, n_points=n_points)
    out = jax.block_until_ready(out)
    assert out.shape == (N, L, d_model)
    assert bool(jnp.all(jnp.isfinite(out)))
    print("KERNEL_OK")
</pallas_src>

<mosaic_0001>
module attributes {stable_mosaic.version = 11 : i64} {
  func.func @_value_proj_kernel(%arg0: i32, %arg1: memref<1x12x32xf32, #tpu.memory_space<vmem>>, %arg2: memref<1x12x1xf32, #tpu.memory_space<vmem>>, %arg3: memref<32x32xbf16, #tpu.memory_space<vmem>>, %arg4: memref<1x32xf32, #tpu.memory_space<vmem>>, %arg5: memref<1x12x32xbf16, #tpu.memory_space<vmem>>) attributes {dimension_semantics = [#tpu.dimension_semantics<parallel>], iteration_bounds = array<i64: 2>, scalar_prefetch = 0 : i64, scratch_operands = 0 : i64, tpu.core_type = #tpu.core_type<tc>, window_params = [{transform_indices = @transform_0, window_bounds = array<i64: 1, 12, 32>}, {transform_indices = @transform_1, window_bounds = array<i64: 1, 12, 1>}, {pipeline_mode = #tpu.pipeline_mode<synchronous>, transform_indices = @transform_2, window_bounds = array<i64: 32, 32>}, {pipeline_mode = #tpu.pipeline_mode<synchronous>, transform_indices = @transform_3, window_bounds = array<i64: 1, 32>}, {transform_indices = @transform_4, window_bounds = array<i64: 1, 12, 32>}]} {
    %c0 = arith.constant 0 : index
    %c0_0 = arith.constant 0 : index
    %c0_1 = arith.constant 0 : index
    %0 = vector.load %arg1[%c0, %c0_0, %c0_1] : memref<1x12x32xf32, #tpu.memory_space<vmem>>, vector<1x12x32xf32>
    %1 = vector.shape_cast %0 : vector<1x12x32xf32> to vector<12x32xf32>
    %2 = arith.truncf %1 : vector<12x32xf32> to vector<12x32xbf16>
    %c0_2 = arith.constant 0 : index
    %c0_3 = arith.constant 0 : index
    %c0_4 = arith.constant 0 : index
    %3 = vector.load %arg2[%c0_2, %c0_3, %c0_4] : memref<1x12x1xf32, #tpu.memory_space<vmem>>, vector<1x12x1xf32>
    %4 = vector.shape_cast %3 : vector<1x12x1xf32> to vector<12x1xf32>
    %cst = arith.constant 1.000000e+00 : f32
    %5 = vector.broadcast %cst : f32 to vector<12x1xf32>
    %6 = arith.subf %5, %4 : vector<12x1xf32>
    %c0_5 = arith.constant 0 : index
    %c0_6 = arith.constant 0 : index
    %7 = vector.load %arg3[%c0_5, %c0_6] : memref<32x32xbf16, #tpu.memory_space<vmem>>, vector<32x32xbf16>
    %cst_7 = arith.constant dense<0.000000e+00> : vector<12x32xf32>
    %8 = tpu.matmul %2, %7, %cst_7 {dimension_numbers = #tpu.dot_dimension_numbers<[1], [0], [0], [1], [0, 0, 1, 1], [], []>} : vector<12x32xbf16>, vector<32x32xbf16>, vector<12x32xf32> -> vector<12x32xf32>
    %c0_8 = arith.constant 0 : index
    %c0_9 = arith.constant 0 : index
    %9 = vector.load %arg4[%c0_8, %c0_9] : memref<1x32xf32, #tpu.memory_space<vmem>>, vector<1x32xf32>
    %10 = vector.broadcast %9 : vector<1x32xf32> to vector<12x32xf32>
    %11 = arith.addf %8, %10 : vector<12x32xf32>
    %12 = vector.broadcast %6 : vector<12x1xf32> to vector<12x32xf32>
    %13 = arith.mulf %11, %12 : vector<12x32xf32>
    %14 = arith.truncf %13 : vector<12x32xf32> to vector<12x32xbf16>
    %c0_10 = arith.constant 0 : index
    %c0_11 = arith.constant 0 : index
    %c0_12 = arith.constant 0 : index
    %15 = vector.load %arg5[%c0_10, %c0_11, %c0_12] : memref<1x12x32xbf16, #tpu.memory_space<vmem>>, vector<1x12x32xbf16>
    %16 = vector.shape_cast %15 : vector<1x12x32xbf16> to vector<12x32xbf16>
    %17 = vector.shape_cast %14 : vector<12x32xbf16> to vector<1x12x32xbf16>
    tpu.vector_store %arg5[%c0_10, %c0_11, %c0_12], %17 {strides = array<i32>} : memref<1x12x32xbf16, #tpu.memory_space<vmem>>, vector<1x12x32xbf16>,
    return
  }
  func.func @transform_0(%arg0: i32) -> (i32, i32, i32) {
    %c0_i32 = arith.constant 0 : i32
    %c0_i32_0 = arith.constant 0 : i32
    %c0_i32_1 = arith.constant 0 : i32
    return %arg0, %c0_i32, %c0_i32_0 : i32, i32, i32
  }
  func.func @transform_1(%arg0: i32) -> (i32, i32, i32) {
    %c0_i32 = arith.constant 0 : i32
    %c0_i32_0 = arith.constant 0 : i32
    %c0_i32_1 = arith.constant 0 : i32
    return %arg0, %c0_i32, %c0_i32_0 : i32, i32, i32
  }
  func.func @transform_2(%arg0: i32) -> (i32, i32) {
    %c0_i32 = arith.constant 0 : i32
    %c0_i32_0 = arith.constant 0 : i32
    %c0_i32_1 = arith.constant 0 : i32
    return %c0_i32, %c0_i32_0 : i32, i32
  }
  func.func @transform_3(%arg0: i32) -> (i32, i32) {
    %c0_i32 = arith.constant 0 : i32
    %c0_i32_0 = arith.constant 0 : i32
    %c0_i32_1 = arith.constant 0 : i32
    return %c0_i32, %c0_i32_0 : i32, i32
  }
  func.func @transform_4(%arg0: i32) -> (i32, i32, i32) {
    %c0_i32 = arith.constant 0 : i32
    %c0_i32_0 = arith.constant 0 : i32
    %c0_i32_1 = arith.constant 0 : i32
    return %arg0, %c0_i32, %c0_i32_0 : i32, i32, i32
  }
}

</mosaic_0001>

<llo_original>
// kernel: tpu_custom_call.1
$region0: #{tpu_custom_call.1}
  #allocation0 [shape = 'u32[]', space=smem, size = 0x4, offset = 0x4, fixed_abs, tag = 'smem constant byte address 0x4 - core index']
  #allocation1 [shape = 'u32[144,128]{1,0:T(1,128)}', space=vmem, size = 0x12000, scoped, tag = 'internal scratch']
  %s0 = inlined_call_operand.vmem [shape: f32[2,12,32], index: 0, kind: input, shape index: {}]
  %s1 = inlined_call_operand.vmem [shape: f32[2,12,1], index: 1, kind: input, shape index: {}]
  %s2 = inlined_call_operand.vmem [shape: bf16[32,32], index: 2, kind: input, shape index: {}]
  %s3 = inlined_call_operand.vmem [shape: f32[1,32], index: 3, kind: input, shape index: {}]
  %s4 = inlined_call_operand.vmem [shape: bf16[2,12,32], index: 4, kind: output, shape index: {}]
  %s5 = sld [smem:[#allocation0]]
  $region49: #{tpu_custom_call.1} parent=0
    _
  %s7 = ssub.s32 1, %s5
  %s8 = scalar_select 0, %s7, %s5
  loop: start=0, step=1, limit=4
  $region2: #{tpu_custom_call.1} parent=0 // loop_pre_header
    _
  $region3: #{tpu_custom_call.1} parent=0 // loop_header
    %s10 = sphi 0, %s14
    %p11 = scmp.ge.s32.totalorder %s10, 4
    %s20 = sphi 0, %s22
    %s23 = sphi 0, %s20
    %s24 = sphi 0, %s23
    %s40 = sphi 0, %s24
    %s46 = sphi 0, %s48
    %s49 = sphi 0, %s46
    %s50 = sphi 0, %s49
    %s66 = sphi 0, %s50
    %s70 = sphi 0, %s70
    %s72 = sphi 0, %s70
    %s73 = sphi 0, %s72
    %s87 = sphi 0, %s73
    %s91 = sphi 0, %s91
    %s93 = sphi 0, %s91
    %s94 = sphi 0, %s93
    %s108 = sphi 0, %s94
    %s114 = sphi 0, %s116
    %s117 = sphi 0, %s114
    %s118 = sphi 0, %s117
    %s134 = sphi 0, %s118
  $region4: #{tpu_custom_call.1} parent=0 // loop_header_branch
    %13 = sbr.rel (%p11) target = $region8
  $region5: #{tpu_custom_call.1} parent=0 // loop_body
    %s15 = ssub.s32 %s10, 1
    %s16 = ssub.s32 %s10, 2
    %s17 = sadd.s32 %s10, 1
    %s18 = ssub.s32 %s10, %s17
    %p19 = scmp.eq.s32.totalorder %s18, 0
    %s21 = sadd.s32 %s20, 1
    %s22 = scalar_select %p19, %s20, %s21
    %p25 = pneg %p19
    %p26 = scmp.eq.s32.totalorder %s10, 1
    %p27 = por %p25, %p26
    %p28 = scmp.ne.s32.totalorder %s20, %s23
    %p29 = scmp.eq.s32.totalorder %s10, 0
    %p30 = por %p28, %p29
    %p31 = scmp.ne.s32.totalorder %s20, %s23
    %p32 = scmp.eq.s32.totalorder %s15, 1
    %p33 = por %p31, %p32
    %p34 = scmp.ne.s32.totalorder %s23, %s24
    %p35 = scmp.eq.s32.totalorder %s15, 0
    %p36 = por %p34, %p35
    %p37 = scmp.ne.s32.totalorder %s23, %s24
    %p38 = scmp.eq.s32.totalorder %s16, 1
    %p39 = por %p37, %p38
    %p41 = scmp.ne.s32.totalorder %s24, %s40
    %p42 = scmp.eq.s32.totalorder %s16, 0
    %p43 = por %p41, %p42
    %s44 = ssub.s32 %s10, %s17
    %p45 = scmp.eq.s32.totalorder %s44, 0
    %s47 = sadd.s32 %s46, 1
    %s48 = scalar_select %p45, %s46, %s47
    %p51 = pneg %p45
    %p52 = scmp.eq.s32.totalorder %s10, 1
    %p53 = por %p51, %p52
    %p54 = scmp.ne.s32.totalorder %s46, %s49
    %p55 = scmp.eq.s32.totalorder %s10, 0
    %p56 = por %p54, %p55
    %p57 = scmp.ne.s32.totalorder %s46, %s49
    %p58 = scmp.eq.s32.totalorder %s15, 1
    %p59 = por %p57, %p58
    %p60 = scmp.ne.s32.totalorder %s49, %s50
    %p61 = scmp.eq.s32.totalorder %s15, 0
    %p62 = por %p60, %p61
    %p63 = scmp.ne.s32.totalorder %s49, %s50
    %p64 = scmp.eq.s32.totalorder %s16, 1
    %p65 = por %p63, %p64
    %p67 = scmp.ne.s32.totalorder %s50, %s66
    %p68 = scmp.eq.s32.totalorder %s16, 0
    %p69 = por %p67, %p68
    %s71 = sadd.s32 %s70, 1
    %p74 = scmp.eq.s32.totalorder %s10, 1
    %p75 = scmp.ne.s32.totalorder %s70, %s72
    %p76 = scmp.eq.s32.totalorder %s10, 0
    %p77 = por %p75, %p76
    %p78 = scmp.ne.s32.totalorder %s70, %s72
    %p79 = scmp.eq.s32.totalorder %s15, 1
    %p80 = por %p78, %p79
    %p81 = scmp.ne.s32.totalorder %s72, %s73
    %p82 = scmp.eq.s32.totalorder %s15, 0
    %p83 = por %p81, %p82
    %p84 = scmp.ne.s32.totalorder %s72, %s73
    %p85 = scmp.eq.s32.totalorder %s16, 1
    %p86 = por %p84, %p85
    %p88 = scmp.ne.s32.totalorder %s73, %s87
    %p89 = scmp.eq.s32.totalorder %s16, 0
    %p90 = por %p88, %p89
    %s92 = sadd.s32 %s91, 1
    %p95 = scmp.eq.s32.totalorder %s10, 1
    %p96 = scmp.ne.s32.totalorder %s91, %s93
    %p97 = scmp.eq.s32.totalorder %s10, 0
    %p98 = por %p96, %p97
    %p99 = scmp.ne.s32.totalorder %s91, %s93
    %p100 = scmp.eq.s32.totalorder %s15, 1
    %p101 = por %p99, %p100
    %p102 = scmp.ne.s32.totalorder %s93, %s94
    %p103 = scmp.eq.s32.totalorder %s15, 0
    %p104 = por %p102, %p103
    %p105 = scmp.ne.s32.totalorder %s93, %s94
    %p106 = scmp.eq.s32.totalorder %s16, 1
    %p107 = por %p105, %p106
    %p109 = scmp.ne.s32.totalorder %s94, %s108
    %p110 = scmp.eq.s32.totalorder %s16, 0
    %p111 = por %p109, %p110
    %s112 = ssub.s32 %s10, %s17
    %p113 = scmp.eq.s32.totalorder %s112, 0
    %s115 = sadd.s32 %s114, 1
    %s116 = scalar_select %p113, %s114, %s115
    %p119 = pneg %p113
    %p120 = scmp.eq.s32.totalorder %s10, 1
    %p121 = por %p119, %p120
    %p122 = scmp.ne.s32.totalorder %s114, %s117
    %p123 = scmp.eq.s32.totalorder %s10, 0
    %p124 = por %p122, %p123
    %p125 = scmp.ne.s32.totalorder %s114, %s117
    %p126 = scmp.eq.s32.totalorder %s15, 1
    %p127 = por %p125, %p126
    %p128 = scmp.ne.s32.totalorder %s117, %s118
    %p129 = scmp.eq.s32.totalorder %s15, 0
    %p130 = por %p128, %p129
    %p131 = scmp.ne.s32.totalorder %s117, %s118
    %p132 = scmp.eq.s32.totalorder %s16, 1
    %p133 = por %p131, %p132
    %p135 = scmp.ne.s32.totalorder %s118, %s134
    %p136 = scmp.eq.s32.totalorder %s16, 0
    %p137 = por %p135, %p136
    %p138 = scmp.le.s32.totalorder 1, %s10
    %p139 = scmp.lt.s32.totalorder %s10, 3
    %p140 = pnand %p138, %p139
    %p141 = pneg %p140
    // Predicated region
    $region9: #{tpu_custom_call.1} parent=5 // pred_check
      _
    $region10: #{tpu_custom_call.1} parent=5 // pred_check_branch
      %143 = sbr.rel (%p140) target = $region12
    $region11: #{tpu_custom_call.1} parent=5 // pred_region
      %s144 = ssub.s32 %s10, 1
      // Predicated region
      $region13: #{tpu_custom_call.1} parent=11 // pred_check
        %p145 = pneg %p83
      $region14: #{tpu_custom_call.1} parent=11 // pred_check_branch
        %147 = sbr.rel (%p145) target = $region16
      $region15: #{tpu_custom_call.1} parent=11 // pred_region
        _
      $region16: #{tpu_custom_call.1} parent=11 // pred_fallthru
        _
      // Predicated region
      $region17: #{tpu_custom_call.1} parent=11 // pred_check
        %p148 = pneg %p104
      $region18: #{tpu_custom_call.1} parent=11 // pred_check_branch
        %150 = sbr.rel (%p148) target = $region20
      $region19: #{tpu_custom_call.1} parent=11 // pred_region
        _
      $region20: #{tpu_custom_call.1} parent=11 // pred_fallthru
        _
    $region12: #{tpu_custom_call.1} parent=5 // pred_fallthru
      _
    %p151 = scmp.lt.s32.totalorder %s10, 2
    // Predicated region
    $region21: #{tpu_custom_call.1} parent=5 // pred_check
      %p152 = pneg %p151
    $region22: #{tpu_custom_call.1} parent=5 // pred_check_branch
      %154 = sbr.rel (%p152) target = $region24
    $region23: #{tpu_custom_call.1} parent=5 // pred_region
      // Predicated region
      $region25: #{tpu_custom_call.1} parent=23 // pred_check
        %p155 = pneg %p30
      $region26: #{tpu_custom_call.1} parent=23 // pred_check_branch
        %157 = sbr.rel (%p155) target = $region28
      $region27: #{tpu_custom_call.1} parent=23 // pred_region
        %p158 = scmp.lt.s32.totalorder %s10, 1
        %s159 = scalar_select %p158, %s10, 1
        %s160 = smul.addr %s159, 2
        %s161 = smul.addr %s160, 8
        %s162 = scalar_lea.vmem %s0, %s161
      $region28: #{tpu_custom_call.1} parent=23 // pred_fallthru
        _
      // Predicated region
      $region29: #{tpu_custom_call.1} parent=23 // pred_check
        %p163 = pneg %p56
      $region30: #{tpu_custom_call.1} parent=23 // pred_check_branch
        %165 = sbr.rel (%p163) target = $region32
      $region31: #{tpu_custom_call.1} parent=23 // pred_region
        %p166 = scmp.lt.s32.totalorder %s10, 1
        %s167 = scalar_select %p166, %s10, 1
        %s168 = smul.addr %s167, 2
        %s169 = smul.addr %s168, 8
        %s170 = scalar_lea.vmem %s1, %s169
      $region32: #{tpu_custom_call.1} parent=23 // pred_fallthru
        _
    $region24: #{tpu_custom_call.1} parent=5 // pred_fallthru
      _
    %p171 = scmp.le.s32.totalorder 1, %s10
    %p172 = scmp.lt.s32.totalorder %s10, 3
    %p173 = pnand %p171, %p172
    %p174 = pneg %p173
    // Predicated region
    $region33: #{tpu_custom_call.1} parent=5 // pred_check
      _
    $region34: #{tpu_custom_call.1} parent=5 // pred_check_branch
      %176 = sbr.rel (%p173) target = $region36
    $region35: #{tpu_custom_call.1} parent=5 // pred_region
      %s177 = ssub.s32 %s10, 1
      %p178 = scmp.lt.s32.totalorder %s15, 1
      %s179 = scalar_select %p178, %s15, 1
      %s180 = smul.addr %s179, 2
      %s181 = smul.addr %s180, 8
      %s182 = scalar_lea.vmem %s0, %s181
      %p183 = pneg %p36
      %p184 = pneg %p33
      %p185 = scmp.lt.s32.totalorder %s15, 1
      %s186 = scalar_select %p185, %s15, 1
      %s187 = smul.addr %s186, 2
      %s188 = smul.addr %s187, 8
      %s189 = scalar_lea.vmem %s1, %s188
      %p190 = pneg %p62
      %p191 = pneg %p59
      %p192 = pneg %p83
      %p193 = pneg %p80
      %p194 = pneg %p104
      %p195 = pneg %p101
      %p196 = pneg %p130
      %p197 = pneg %p127
      %p198 = scmp.lt.s32.totalorder %s15, 1
      %s199 = scalar_select %p198, %s15, 1
      %s200 = smul.addr %s199, 2
      %s201 = smul.addr %s200, 4
      %s202 = scalar_lea.vmem %s4, %s201
      %p203 = scmp.lt.s32.totalorder %s15, 1
      %s204 = scalar_select %p203, %s15, 1
      %s205 = smul.addr %s204, 2
      %s206 = smul.addr %s205, 8
      %s207 = scalar_lea.vmem %s0, %s206
      %p208 = scmp.lt.s32.totalorder %s15, 1
      %s209 = scalar_select %p208, %s15, 1
      %s210 = smul.addr %s209, 2
      %s211 = smul.addr %s210, 8
      %s212 = scalar_lea.vmem %s1, %s211
      %p213 = scmp.lt.s32.totalorder %s15, 1
      %s214 = scalar_select %p213, %s15, 1
      %s215 = smul.addr %s214, 2
      %s216 = smul.addr %s215, 4
      %s217 = scalar_lea.vmem %s4, %s216
      %v219 = vld [vmem:[%s207] sm:$0xff]
      %v220 = vld [vmem:[%s207 + $0x8] sm:$0xf]
      %v221 = vpack.c.bf16 %v220, %v219
      %v222 = vld [vmem:[%s212] sm:$0xff]
      %v223 = vld [vmem:[%s212 + $0x8] sm:$0xf]
      %v224 = vsub.f32 1.0, %v222
      %v225 = vsub.f32 1.0, %v223
      %v226 = vld [vmem:[%s2] sm:$0xf]
      %v227 = vld [vmem:[%s2 + $0x4] sm:$0xf]
      %v228 = vld [vmem:[%s2 + $0x8] sm:$0xf]
      %v229 = vld [vmem:[%s2 + $0xc] sm:$0xf]
      %v230 = vld [vmem:[%s3] sm:$0x1]
      %v232 = vlaneseq
      %v233 = vshrl.u32 %v232, 7
      %v234 = vsub.s32 0, %v233
      %v235 = vrot.slane %v230, %v234
      %v241 = vunpack.c.l.b16 %v226
      %v242 = vunpack.c.l.b16 %v227
      %v243 = vunpack.c.l.b16 %v228
      %v244 = vunpack.c.l.b16 %v229
      %v245 = vpack.c.b16 %v242, %v241
      %v246 = vpack.c.b16 %v244, %v243
      %vm249 = vcmask 261120
      %v251 = vsel %vm249, %v221, 0
      %253 = vmatprep.subr.bf16.mxu0 0
      %254 = vmatpush1.bf16.msra.mxu0 %v245
      %255 = vmatprep.subr.bf16.mxu0 0
      %256 = vmatpush1.bf16.msra.mxu0 %v246
      %257 = vmatprep.subr.bf16.mxu0 0
      %258 = vmatpush1.bf16.msra.mxu0 0
      %259 = vmatprep.subr.bf16.mxu0 0
      %260 = vmatpush1.bf16.msra.mxu0 0
      %261 = vmatprep.subr.bf16.mxu0 0
      %262 = vmatpush1.bf16.msra.mxu0 0
      %263 = vmatprep.subr.bf16.mxu0 0
      %264 = vmatpush1.bf16.msra.mxu0 0
      %265 = vmatprep.subr.bf16.mxu0 0
      %266 = vmatpush1.bf16.msra.mxu0 0
      %267 = vmatprep.subr.bf16.mxu0 0
      %268 = vmatpush1.bf16.msra.mxu0 0
      %269 = vmatprep.subr.bf16.mxu0 0
      %270 = vmatpush1.bf16.msra.mxu0 0
      %271 = vmatprep.subr.bf16.mxu0 0
      %272 = vmatpush1.bf16.msra.mxu0 0
      %273 = vmatprep.subr.bf16.mxu0 0
      %274 = vmatpush1.bf16.msra.mxu0 0
      %275 = vmatprep.subr.bf16.mxu0 0
      %276 = vmatpush1.bf16.msra.mxu0 0
      %277 = vmatprep.subr.bf16.mxu0 0
      %278 = vmatpush1.bf16.msra.mxu0 0
      %279 = vmatprep.subr.bf16.mxu0 0
      %280 = vmatpush1.bf16.msra.mxu0 0
      %281 = vmatprep.subr.bf16.mxu0 0
      %282 = vmatpush1.bf16.msra.mxu0 0
      %283 = vmatprep.subr.bf16.mxu0 0
      %284 = vmatpush1.bf16.msra.mxu0 0
      %285 = vmatprep.mubr.bf16.mxu0 0
      %286 = vmatmul.mubr.bf16.gmra.mrb[0].mxu0 %v251
      %v287 = vpop.f32.mrb[0].mxu0
      %v288 = vadd.f32 %v235, %v287
      %v289 = vpop.f32.mrb[0].mxu0
      %v290 = vpop.f32.mrb[0].mxu0
      %v291 = vadd.f32 %v235, %v290
      %v292 = vpop.f32.mrb[0].mxu0
      %293 = vdwg.mxu0
      %295 = vset.pattern.permute.xlu0 0
      %296 = vperm.xlu0 %295, %v224
      %v297 = vpop.permute.xlu0 %296
      %300 = vset.pattern.permute.xlu0 0
      %301 = vperm.xlu0 %300, %v225
      %v302 = vpop.permute.xlu0 %301
      %v304 = vmul.f32 %v288, %v297
      %v305 = vmul.f32 %v291, %v302
      %v306 = vpack.c.bf16 %v305, %v304
      %v308 = vunpack.c.l.b16 %v306
      %v309 = vunpack.c.h.b16 %v306
      %v310 = vpack.c.b16 %v308, %v308
      %v311 = vpack.c.b16 %v309, %v309
      %vm314 = vcmask 257024
      %315 = vst.msk [vmem:[%s217] sm:$0xf] %vm314, %v310
      %vm316 = vcmask 254976
      %317 = vst.msk [vmem:[%s217 + $0x4] sm:$0x3] %vm316, %v311
      %p318 = scmp.lt.s32.totalorder %s15, 1
      %s319 = scalar_select %p318, %s15, 1
      %s320 = smul.addr %s319, 2
      %s321 = smul.addr %s320, 4
      %s322 = scalar_lea.vmem %s4, %s321
      // Predicated region
      $region37: #{tpu_custom_call.1} parent=35 // pred_check
        %p323 = pneg %p127
      $region38: #{tpu_custom_call.1} parent=35 // pred_check_branch
        %325 = sbr.rel (%p323) target = $region40
      $region39: #{tpu_custom_call.1} parent=35 // pred_region
        _
      $region40: #{tpu_custom_call.1} parent=35 // pred_fallthru
        _
    $region36: #{tpu_custom_call.1} parent=5 // pred_fallthru
      _
    %p326 = scmp.le.s32.totalorder 2, %s10
    // Predicated region
    $region41: #{tpu_custom_call.1} parent=5 // pred_check
      %p327 = pneg %p326
    $region42: #{tpu_custom_call.1} parent=5 // pred_check_branch
      %329 = sbr.rel (%p327) target = $region44
    $region43: #{tpu_custom_call.1} parent=5 // pred_region
      %s330 = ssub.s32 %s10, 2
      // Predicated region
      $region45: #{tpu_custom_call.1} parent=43 // pred_check
        %p331 = pneg %p133
      $region46: #{tpu_custom_call.1} parent=43 // pred_check_branch
        %333 = sbr.rel (%p331) target = $region48
      $region47: #{tpu_custom_call.1} parent=43 // pred_region
        %p334 = scmp.lt.s32.totalorder %s16, 1
        %s335 = scalar_select %p334, %s16, 1
        %s336 = smul.addr %s335, 2
        %s337 = smul.addr %s336, 4
        %s338 = scalar_lea.vmem %s4, %s337
      $region48: #{tpu_custom_call.1} parent=43 // pred_fallthru
        _
    $region44: #{tpu_custom_call.1} parent=5 // pred_fallthru
      _
  $region6: #{tpu_custom_call.1} parent=0 // loop_footer
    %s14 = sadd.s32 1, %s10
  $region7: #{tpu_custom_call.1} parent=0 // loop_footer_branch
    %9 = sbr.rel target = $region3
  $region8: #{tpu_custom_call.1} parent=0 // loop_exit
    _

</llo_original>
